<compile_context>
chip_gen: v7x
topology: tpu7x:2x2x1
jax: 0.10.0
libtpu: 0.0.40
codegen_flags: <defaults>
</compile_context>

<pallas_src>
import jax
import jax.numpy as jnp
from jax.experimental import pallas as pl
from jax.experimental.pallas import tpu as pltpu


def _dma_copy_kernel(x_hbm, o_hbm, sem):
    # Single full-ref HBM->HBM DMA; no VMEM staging, no vreg traffic.
    cp = pltpu.make_async_copy(x_hbm, o_hbm, sem)
    cp.start()
    cp.wait()


def _hbm_dma_copy(x: jnp.ndarray) -> jnp.ndarray:
    """Materialized identity copy of `x` via a direct HBM->HBM DMA."""
    nbytes = x.size * x.dtype.itemsize
    return pl.pallas_call(
        _dma_copy_kernel,
        out_shape=jax.ShapeDtypeStruct(x.shape, x.dtype),
        in_specs=[pl.BlockSpec(memory_space=pl.ANY)],
        out_specs=pl.BlockSpec(memory_space=pl.ANY),
        scratch_shapes=[pltpu.SemaphoreType.DMA],
        cost_estimate=pl.CostEstimate(
            flops=0, transcendentals=0, bytes_accessed=2 * nbytes),
    )(x)


def input_encoder_forward(x: jnp.ndarray, *, force_kernel: bool = False) -> jnp.ndarray:
    """Pallas equivalent of InputEncoder.forward (identity).

    Default path is a pure no-op (`return x`): zero FLOPs, zero HBM traffic.
    `force_kernel=True` produces a freshly materialized copy via one
    HBM->HBM DMA inside a Pallas kernel.
    """
    if not force_kernel:
        # forward(x) = x : nothing to compute, nothing to move.
        return x
    if x.size == 0:
        return x
    return _hbm_dma_copy(x)


class InputEncoder:
    """JAX/Pallas port of the PyTorch InputEncoder (identity encoder)."""

    def __init__(self, input_dims: int):
        self.output_dims = input_dims  # no learnable parameters

    def __call__(self, inputs: jnp.ndarray, *, force_kernel: bool = False) -> jnp.ndarray:
        return input_encoder_forward(inputs, force_kernel=force_kernel)


if __name__ == "__main__":
    key = jax.random.PRNGKey(0)
    k1, k2, k3 = jax.random.split(key, 3)

    input_dims = 3
    encoder = InputEncoder(input_dims)
    assert encoder.output_dims == input_dims

    # 1) Default path: pure no-op identity (no kernel, no HBM traffic).
    x_small = jax.random.normal(k1, (128, input_dims), dtype=jnp.float32)
    y_small = jax.block_until_ready(encoder(x_small))
    assert y_small.shape == x_small.shape and y_small.dtype == x_small.dtype
    assert bool(jnp.all(y_small == x_small))

    # 2) Forced materialized copy: exercises the HBM->HBM DMA Pallas kernel.
    x_force = jax.random.normal(k2, (128, input_dims), dtype=jnp.float32)
    y_force = jax.block_until_ready(encoder(x_force, force_kernel=True))
    assert y_force.shape == x_force.shape and y_force.dtype == x_force.dtype
    assert bool(jnp.all(y_force == x_force))

    # 3) Odd shape + sub-32-bit dtype: DMA path has no padding / tiling
    #    constraints, so ragged bf16 inputs copy exactly with no wrapper pads.
    x_ragged = jax.random.normal(k3, (37, input_dims), dtype=jnp.bfloat16)
    y_ragged = jax.block_until_ready(
        input_encoder_forward(x_ragged, force_kernel=True))
    assert y_ragged.shape == x_ragged.shape and y_ragged.dtype == x_ragged.dtype
    assert bool(jnp.all(y_ragged == x_ragged))

    print("KERNEL_OK")
</pallas_src>

<mosaic_0001>
module attributes {stable_mosaic.version = 11 : i64} {
  func.func @_dma_copy_kernel(%arg0: memref<128x3xf32, #tpu.memory_space<any>>, %arg1: memref<128x3xf32, #tpu.memory_space<any>>, %arg2: memref<!tpu.dma_semaphore, #tpu.memory_space<semaphore_mem>>) attributes {dimension_semantics = [], scalar_prefetch = 0 : i64, scratch_operands = 1 : i64, tpu.core_type = #tpu.core_type<tc>} {
    tpu.enqueue_dma source(%arg0 : memref<128x3xf32, #tpu.memory_space<any>>) target(%arg1 : memref<128x3xf32, #tpu.memory_space<any>>) target_semaphore(%arg2 : memref<!tpu.dma_semaphore, #tpu.memory_space<semaphore_mem>>)
    tpu.wait_dma2 semaphore(%arg2 : memref<!tpu.dma_semaphore, #tpu.memory_space<semaphore_mem>>) src(%arg0 : memref<128x3xf32, #tpu.memory_space<any>>) dst(%arg1 : memref<128x3xf32, #tpu.memory_space<any>>)
    return
  }
}

</mosaic_0001>

<llo_original>
// kernel: tpu_custom_call.1
$region0: #{tpu_custom_call.1}
  #allocation0 [shape = 'u32[]', space=smem, size = 0x4, offset = 0x4, fixed_abs, tag = 'smem constant byte address 0x4 - core index']
  #allocation1 [shape = 'u32[144,128]{1,0:T(1,128)}', space=vmem, size = 0x12000, scoped, tag = 'internal scratch']
  #allocation2 [shape = 's32[1]{0}', space=sflag, size = 0x4, scoped, tag = 'scratch operand']
  #allocation3 [shape = 's32[]', space=sflag, size = 0x4, offset = 0, fixed_abs, tag = 'sflag constant byte address 0x0 - dummy sync flag']
  %s0 = inlined_call_operand.vmem [shape: f32[128,3], index: 0, kind: input, shape index: {}]
  %s1 = inlined_call_operand.vmem [shape: f32[128,3], index: 1, kind: output, shape index: {}]
  %s2 = sld [smem:[#allocation0]]
  $region36: #{tpu_custom_call.1} parent=0
    _
  %s4 = ssub.s32 1, %s2
  %s5 = scalar_select 0, %s4, %s2
  %p7 = scmp.lt.u32.totalorder 128, 8
  %p8 = pneg %p7
  // Predicated region
  $region2: #{tpu_custom_call.1} parent=0 // pred_check
    _
  $region3: #{tpu_custom_call.1} parent=0 // pred_check_branch
    %10 = sbr.rel (%p7) target = $region5
  $region4: #{tpu_custom_call.1} parent=0 // pred_region
    %s25 = sand.u32 128, 7
    %p26 = scmp.eq.s32.totalorder %s25, 0
    // Predicated region
    $region17: #{tpu_custom_call.1} parent=4 // pred_check
      %p27 = pneg %p26
    $region18: #{tpu_custom_call.1} parent=4 // pred_check_branch
      %29 = sbr.rel (%p27) target = $region20
    $region19: #{tpu_custom_call.1} parent=4 // pred_region
      loop: start=0, step=1, limit=1
      $region21: #{tpu_custom_call.1} parent=19 // loop_pre_header
        _
      $region22: #{tpu_custom_call.1} parent=19 // loop_header
        %s31 = sphi 0, %s35
        %p32 = scmp.ge.s32.totalorder %s31, 1
        %s36 = sphi %s0, %s0
        %s37 = sphi %s1, %s1
      $region23: #{tpu_custom_call.1} parent=19 // loop_header_branch
        %34 = sbr.rel (%p32) target = $region27
      $region24: #{tpu_custom_call.1} parent=19 // loop_body
        %v38 = vld [vmem:[%s36] sm:$0xff]
        %39 = vst [vmem:[%s37] sm:$0xff] %v38
        %v40 = vld [vmem:[%s36 + $0x8] sm:$0xff]
        %41 = vst [vmem:[%s37 + $0x8] sm:$0xff] %v40
        %v42 = vld [vmem:[%s36 + $0x10] sm:$0xff]
        %43 = vst [vmem:[%s37 + $0x10] sm:$0xff] %v42
        %v44 = vld [vmem:[%s36 + $0x18] sm:$0xff]
        %45 = vst [vmem:[%s37 + $0x18] sm:$0xff] %v44
        %v46 = vld [vmem:[%s36 + $0x20] sm:$0xff]
        %47 = vst [vmem:[%s37 + $0x20] sm:$0xff] %v46
        %v48 = vld [vmem:[%s36 + $0x28] sm:$0xff]
        %49 = vst [vmem:[%s37 + $0x28] sm:$0xff] %v48
        %v50 = vld [vmem:[%s36 + $0x30] sm:$0xff]
        %51 = vst [vmem:[%s37 + $0x30] sm:$0xff] %v50
        %v52 = vld [vmem:[%s36 + $0x38] sm:$0xff]
        %53 = vst [vmem:[%s37 + $0x38] sm:$0xff] %v52
        %v54 = vld [vmem:[%s36 + $0x40] sm:$0xff]
        %55 = vst [vmem:[%s37 + $0x40] sm:$0xff] %v54
        %v56 = vld [vmem:[%s36 + $0x48] sm:$0xff]
        %57 = vst [vmem:[%s37 + $0x48] sm:$0xff] %v56
        %v58 = vld [vmem:[%s36 + $0x50] sm:$0xff]
        %59 = vst [vmem:[%s37 + $0x50] sm:$0xff] %v58
        %v60 = vld [vmem:[%s36 + $0x58] sm:$0xff]
        %61 = vst [vmem:[%s37 + $0x58] sm:$0xff] %v60
        %v62 = vld [vmem:[%s36 + $0x60] sm:$0xff]
        %63 = vst [vmem:[%s37 + $0x60] sm:$0xff] %v62
        %v64 = vld [vmem:[%s36 + $0x68] sm:$0xff]
        %65 = vst [vmem:[%s37 + $0x68] sm:$0xff] %v64
        %v66 = vld [vmem:[%s36 + $0x70] sm:$0xff]
        %67 = vst [vmem:[%s37 + $0x70] sm:$0xff] %v66
        %v68 = vld [vmem:[%s36 + $0x78] sm:$0xff]
        %69 = vst [vmem:[%s37 + $0x78] sm:$0xff] %v68
      $region25: #{tpu_custom_call.1} parent=19 // loop_footer
        %s35 = sadd.s32 1, %s31
      $region26: #{tpu_custom_call.1} parent=19 // loop_footer_branch
        %30 = sbr.rel target = $region22
      $region27: #{tpu_custom_call.1} parent=19 // loop_exit
        _
    $region20: #{tpu_custom_call.1} parent=4 // pred_fallthru
      _
    %p70 = pneg %p26
    // Predicated region
    $region28: #{tpu_custom_call.1} parent=4 // pred_check
      _
    $region29: #{tpu_custom_call.1} parent=4 // pred_check_branch
      %72 = sbr.rel (%p26) target = $region31
    $region30: #{tpu_custom_call.1} parent=4 // pred_region
      %s73 = sand.u32 128, 7
    $region31: #{tpu_custom_call.1} parent=4 // pred_fallthru
      _
  $region5: #{tpu_custom_call.1} parent=0 // pred_fallthru
    _
  // Predicated region
  $region6: #{tpu_custom_call.1} parent=0 // pred_check
    %p11 = pneg %p7
  $region7: #{tpu_custom_call.1} parent=0 // pred_check_branch
    %13 = sbr.rel (%p11) target = $region9
  $region8: #{tpu_custom_call.1} parent=0 // pred_region
    %s14 = sshllo.u32 0, 128
    loop: start=0, step=1, limit=1
    $region10: #{tpu_custom_call.1} parent=8 // loop_pre_header
      _
    $region11: #{tpu_custom_call.1} parent=8 // loop_header
      %s16 = sphi 0, %s20
      %p17 = scmp.ge.s32.totalorder %s16, 1
      %s21 = sphi %s0, %s0
      %s22 = sphi %s1, %s1
    $region12: #{tpu_custom_call.1} parent=8 // loop_header_branch
      %19 = sbr.rel (%p17) target = $region16
    $region13: #{tpu_custom_call.1} parent=8 // loop_body
      %v23 = vld [vmem:[%s21] sm:%s14]
      %24 = vst [vmem:[%s22] sm:%s14] %v23
    $region14: #{tpu_custom_call.1} parent=8 // loop_footer
      %s20 = sadd.s32 1, %s16
    $region15: #{tpu_custom_call.1} parent=8 // loop_footer_branch
      %15 = sbr.rel target = $region11
    $region16: #{tpu_custom_call.1} parent=8 // loop_exit
      _
  $region9: #{tpu_custom_call.1} parent=0 // pred_fallthru
    _
  // Predicated region
  $region32: #{tpu_custom_call.1} parent=0 // pred_check
    _
  $region33: #{tpu_custom_call.1} parent=0 // pred_check_branch
    %76 = sbr.rel (0) target = $region35
  $region34: #{tpu_custom_call.1} parent=0 // pred_region
    %77 = vsyncadd [#allocation2], 2048
  $region35: #{tpu_custom_call.1} parent=0 // pred_fallthru
    _
  %s78 = smul.u32 128, 1
  %s79 = sshll.u32 %s78, 4
  %80 = dma.done [#allocation2], %s79
  %81 = vsyncmov [#allocation2]
  %s82 = vpop.sfrf %81
  %p83 = scmp.eq.s32.totalorder %s82, 0
  %p84 = pneg %p83
  %86 = shalt.err (%p84)

</llo_original>
